<compile_context>
chip_gen: v5e
topology: v5e:2x2
jax: 0.10.0
libtpu: 0.0.40
codegen_flags: <defaults>
</compile_context>

<pallas_src>
import jax
import jax.numpy as jnp
from jax.experimental import pallas as pl
from jax.experimental.pallas import tpu as pltpu

_LANES = 128


def _mish_kernel(x_ref, o_ref):
    x = x_ref[...].astype(jnp.float32)
    # softplus(x) = log1p(exp(x)).  With e = exp(x):
    #   tanh(softplus(x)) = ((1+e)^2 - 1) / ((1+e)^2 + 1) = d / (d + 2),  d = e*(e+2)
    # Clamp the exp argument at 20 (torch's softplus threshold); for x > 20 torch
    # returns softplus(x) = x and tanh(x) == 1 exactly in f32, which the where()
    # reproduces.  e <= exp(20) ~ 4.9e8 so d <= ~2.4e17: no f32 overflow.
    e = jnp.exp(jnp.minimum(x, 20.0))              # EUP op #1 (exp)
    d = e * (e + 2.0)
    dp2 = d + 2.0
    r = pl.reciprocal(dp2, approx=True)            # EUP op #2 (vrcp, approximate)
    r = r * (2.0 - dp2 * r)                        # Newton step on the VPU: free (HBM-bound)
    y = x * jnp.where(x > 20.0, 1.0, d * r)
    o_ref[...] = y.astype(o_ref.dtype)


def _mish_ref(x):
    # Pure-JAX reference matching torch: x * tanh(softplus(x)), softplus threshold=20.
    xf = x.astype(jnp.float32)
    sp = jnp.where(xf > 20.0, xf, jnp.log1p(jnp.exp(jnp.minimum(xf, 20.0))))
    return (xf * jnp.tanh(sp)).astype(x.dtype)


def _device_kind() -> str:
    try:
        return jax.devices()[0].device_kind.lower()
    except Exception:
        return ""


def _default_tile_rows(kind: str) -> int:
    if "v7" in kind or "7x" in kind:
        return 16384   # 8 MiB f32 block; ~32 MiB live (in+out, double-buffered)
    if "v6" in kind:
        return 8192    # 4 MiB block; ~16 MiB live
    return 4096        # v5e / unknown: 2 MiB block; ~8 MiB live (under 16 MiB default)


def _dimension_semantics(kind: str):
    # Only CORE_PARALLEL actually splits a grid axis across the 2 TensorCores of
    # a v7x chip; "parallel" vs "arbitrary" is a measured no-op on 1-TC chips.
    if "v7" in kind or "7x" in kind:
        return (pltpu.CORE_PARALLEL,)
    return ("parallel",)


def mish(x: jax.Array, *, tile_rows: int | None = None,
         min_pallas_elements: int = 1 << 16) -> jax.Array:
    """Elementwise Mish. Streams a lane-dense (rows, 128) slab through VMEM."""
    orig_shape = x.shape
    dtype = x.dtype
    n = x.size

    if n == 0 or n < min_pallas_elements:
        # For tiny tensors the fixed pallas_call/DMA-setup overhead dominates;
        # fused XLA elementwise is already at the HBM roofline there.
        return _mish_ref(x)

    itemsize = jnp.dtype(dtype).itemsize
    sub = max(8, 32 // itemsize)   # sublane granule: 8 (f32), 16 (bf16), 32 (8-bit)

    rows = pl.cdiv(n, _LANES)
    padded_n = rows * _LANES

    x_flat = jnp.ravel(x)
    needs_pad = padded_n != n
    if needs_pad:
        # Rare (< 128 pad elements), but jnp.pad + the output slice are each a
        # full-tensor HBM copy.  mish(0) == 0, so zero-pad is numerically safe.
        # TODO(synk): handle the <128-element tail with a tiny separate jnp op
        # instead of the full-tensor pad/slice copies.
        x_flat = jnp.pad(x_flat, (0, padded_n - n))
    x2d = x_flat.reshape(rows, _LANES)

    kind = _device_kind()
    if tile_rows is None:
        tile_rows = _default_tile_rows(kind)
    # Block rows: multiple of the sublane granule, no bigger than the rounded-up
    # row count.  Pallas masks the ragged final block, so `rows` itself need not
    # be sublane-aligned — only block_shape must satisfy the (8,128) rule.
    tile_rows = max(sub, (tile_rows // sub) * sub)
    rows_cap = ((rows + sub - 1) // sub) * sub
    tile_rows = min(tile_rows, rows_cap)

    grid = (pl.cdiv(rows, tile_rows),)

    block_bytes = tile_rows * _LANES * itemsize
    # in + out, each double-buffered, plus slack; capped under v7x's 64 MiB VMEM.
    vmem_limit = int(min(48 << 20, max(32 << 20, 4 * block_bytes + (4 << 20))))

    out2d = pl.pallas_call(
        _mish_kernel,
        out_shape=jax.ShapeDtypeStruct((rows, _LANES), dtype),
        grid_spec=pltpu.PrefetchScalarGridSpec(
            num_scalar_prefetch=0,
            grid=grid,
            in_specs=[pl.BlockSpec((tile_rows, _LANES), lambda i: (i, 0))],
            out_specs=pl.BlockSpec((tile_rows, _LANES), lambda i: (i, 0)),
        ),
        compiler_params=pltpu.CompilerParams(
            dimension_semantics=_dimension_semantics(kind),
            vmem_limit_bytes=vmem_limit,
        ),
        cost_estimate=pl.CostEstimate(
            flops=10 * n,
            transcendentals=2 * n,
            bytes_accessed=2 * n * itemsize,
        ),
    )(x2d)

    out_flat = out2d.reshape(-1)
    if needs_pad:
        out_flat = out_flat[:n]
    return out_flat.reshape(orig_shape)


if __name__ == "__main__":
    key = jax.random.PRNGKey(0)
    # NCHW, matching the PyTorch module's typical conv-activation usage.
    x = jax.random.normal(key, (2, 4, 16, 16), dtype=jnp.float32) * 3.0

    # min_pallas_elements=0 forces the Pallas path even for this small test tensor
    # (the default short-circuits tiny inputs to fused XLA elementwise).
    y = mish(x, min_pallas_elements=0)
    jax.block_until_ready(y)

    y_ref = _mish_ref(x)
    assert y.shape == x.shape and y.dtype == x.dtype
    # Newton-refined reciprocal keeps relative error ~1e-5 even with a
    # bf16-quality base approximation, so tolerance is tightened vs 1e-3.
    assert jnp.allclose(y, y_ref, atol=1e-4, rtol=1e-4), "mismatch vs reference"

    print("KERNEL_OK")
</pallas_src>

<mosaic_0001>
module attributes {stable_mosaic.version = 11 : i64} {
  func.func @_mish_kernel(%arg0: i32, %arg1: memref<16x128xf32, #tpu.memory_space<vmem>>, %arg2: memref<16x128xf32, #tpu.memory_space<vmem>>) attributes {dimension_semantics = [#tpu.dimension_semantics<parallel>], iteration_bounds = array<i64: 1>, scalar_prefetch = 0 : i64, scratch_operands = 0 : i64, tpu.core_type = #tpu.core_type<tc>, window_params = [{transform_indices = @transform_0, window_bounds = array<i64: 16, 128>}, {transform_indices = @transform_1, window_bounds = array<i64: 16, 128>}]} {
    %c0 = arith.constant 0 : index
    %c0_0 = arith.constant 0 : index
    %0 = vector.load %arg1[%c0, %c0_0] : memref<16x128xf32, #tpu.memory_space<vmem>>, vector<16x128xf32>
    %cst = arith.constant 2.000000e+01 : f32
    %1 = vector.broadcast %cst : f32 to vector<16x128xf32>
    %2 = arith.minimumf %0, %1 : vector<16x128xf32>
    %3 = math.exp %2 : vector<16x128xf32>
    %cst_1 = arith.constant 2.000000e+00 : f32
    %4 = vector.broadcast %cst_1 : f32 to vector<16x128xf32>
    %5 = arith.addf %3, %4 : vector<16x128xf32>
    %6 = arith.mulf %3, %5 : vector<16x128xf32>
    %cst_2 = arith.constant 2.000000e+00 : f32
    %7 = vector.broadcast %cst_2 : f32 to vector<16x128xf32>
    %8 = arith.addf %6, %7 : vector<16x128xf32>
    %9 = tpu.reciprocal %8 {approx = true} : vector<16x128xf32> -> vector<16x128xf32>
    %10 = arith.mulf %8, %9 : vector<16x128xf32>
    %cst_3 = arith.constant 2.000000e+00 : f32
    %11 = vector.broadcast %cst_3 : f32 to vector<16x128xf32>
    %12 = arith.subf %11, %10 : vector<16x128xf32>
    %13 = arith.mulf %9, %12 : vector<16x128xf32>
    %cst_4 = arith.constant 2.000000e+01 : f32
    %14 = vector.broadcast %cst_4 : f32 to vector<16x128xf32>
    %15 = arith.cmpf ogt, %0, %14 : vector<16x128xf32>
    %16 = arith.mulf %6, %13 : vector<16x128xf32>
    %cst_5 = arith.constant 1.000000e+00 : f32
    %17 = vector.broadcast %cst_5 : f32 to vector<16x128xf32>
    %18 = arith.select %15, %17, %16 : vector<16x128xi1>, vector<16x128xf32>
    %19 = arith.mulf %0, %18 : vector<16x128xf32>
    %c0_6 = arith.constant 0 : index
    %c0_7 = arith.constant 0 : index
    %20 = vector.load %arg2[%c0_6, %c0_7] : memref<16x128xf32, #tpu.memory_space<vmem>>, vector<16x128xf32>
    tpu.vector_store %arg2[%c0_6, %c0_7], %19 {strides = array<i32>} : memref<16x128xf32, #tpu.memory_space<vmem>>, vector<16x128xf32>,
    return
  }
  func.func @transform_0(%arg0: i32) -> (i32, i32) {
    %c0_i32 = arith.constant 0 : i32
    %c0_i32_0 = arith.constant 0 : i32
    return %arg0, %c0_i32 : i32, i32
  }
  func.func @transform_1(%arg0: i32) -> (i32, i32) {
    %c0_i32 = arith.constant 0 : i32
    %c0_i32_0 = arith.constant 0 : i32
    return %arg0, %c0_i32 : i32, i32
  }
}

</mosaic_0001>

<llo_original>
// kernel: tpu_custom_call.1
$region0: #{tpu_custom_call.1}
  #allocation0 [shape = 'u32[]', space=smem, size = 0x4, offset = 0x4, fixed_abs, tag = 'smem constant byte address 0x4 - core index']
  #allocation1 [shape = 'u32[72,128]{1,0:T(1,128)}', space=vmem, size = 0x9000, scoped, tag = 'internal scratch']
  %s0 = inlined_call_operand.hbm [shape: f32[16,128], index: 0, kind: input, shape index: {}]
  %s1 = inlined_call_operand.hbm [shape: f32[16,128], index: 1, kind: output, shape index: {}]
  %s2 = sld [smem:[#allocation0]]
  $region18: #{tpu_custom_call.1} parent=0
    _
  %s4 = ssub.s32 1, %s2
  %s5 = scalar_select 0, %s4, %s2
  $region1: #{tpu_custom_call.1} parent=0
    #allocation2 [shape = 'u8[8192]{0}', space=vmem, size = 0x2000, scoped, tag = 'input window, operand 0, single buffered']
    #allocation3 [shape = 's32[1]{0}', space=sflag, size = 0x4, scoped, tag = 'scoped memory for tpu_custom_call.1']
    #allocation4 [shape = 's32[1]{0}', space=sflag, size = 0x4, scoped, tag = 'scoped memory for tpu_custom_call.1']
    #allocation5 [shape = 'u8[8192]{0}', space=vmem, size = 0x2000, scoped, tag = 'output window, operand 0, single buffered']
    %6 = vsyncpa [#allocation3], 0
    %7 = vsyncpa [#allocation4], 0
    // Predicated region
    $region2: #{tpu_custom_call.1} parent=1 // pred_check
      _
    $region3: #{tpu_custom_call.1} parent=1 // pred_check_branch
      %9 = sbr.rel (0) target = $region5
    $region4: #{tpu_custom_call.1} parent=1 // pred_region
      %11 = vsyncadd [#allocation3], 0
      %s12 = sshll.u32 %s0, 4
      %s13 = int_to_ptr.hbm [resolvable:$true] %s12
      %s14 = sshll.u32 [#allocation2], 4
      %s15 = int_to_ptr.vmem [resolvable:$true] %s14
      %20 = dma.hbm_to_vmem [thread:$0]  %s13, 256, %s15, [#allocation3], 128, 128, 8
    $region5: #{tpu_custom_call.1} parent=1 // pred_fallthru
      _
    // Predicated region
    $region6: #{tpu_custom_call.1} parent=1 // pred_check
      _
    $region7: #{tpu_custom_call.1} parent=1 // pred_check_branch
      %22 = sbr.rel (0) target = $region9
    $region8: #{tpu_custom_call.1} parent=1 // pred_region
      %24 = dma.done [#allocation3], 256
    $region9: #{tpu_custom_call.1} parent=1 // pred_fallthru
      _
    %v25 = vld [vmem:[#allocation2] sm:$0xff]
    %v26 = vld [vmem:[#allocation2 + $0x8] sm:$0xff]
    %v27 = vmin.f32 %v25, 20.0
    %v28 = vmin.f32 %v26, 20.0
    %v29 = vmul.f32 %v27, 1.442695
    %v30 = vpow.pop %v29
    %v31 = vmul.f32 %v28, 1.442695
    %v32 = vpow.pop %v31
    %v33 = vadd.f32 %v30, 2.0
    %v34 = vadd.f32 %v32, 2.0
    %v35 = vmul.f32 %v30, %v33
    %v36 = vmul.f32 %v32, %v34
    %v37 = vadd.f32 %v35, 2.0
    %v38 = vadd.f32 %v36, 2.0
    %v39 = vrcp.pop %v37
    %v40 = vrcp.pop %v38
    %v41 = vmul.f32 %v37, %v39
    %v42 = vmul.f32 %v38, %v40
    %v43 = vsub.f32 2.0, %v41
    %v44 = vsub.f32 2.0, %v42
    %v45 = vmul.f32 %v39, %v43
    %v46 = vmul.f32 %v40, %v44
    %vm47 = vcmp.gt.f32.partialorder %v25, 20.0
    %vm48 = vcmp.gt.f32.partialorder %v26, 20.0
    %v49 = vmul.f32 %v35, %v45
    %v50 = vmul.f32 %v36, %v46
    %v51 = vsel %vm47, 1.0, %v49
    %v52 = vsel %vm48, 1.0, %v50
    %v53 = vmul.f32 %v25, %v51
    %v54 = vmul.f32 %v26, %v52
    %55 = vst [vmem:[#allocation5] sm:$0xff] %v53
    %56 = vst [vmem:[#allocation5 + $0x8] sm:$0xff] %v54
    // Predicated region
    $region10: #{tpu_custom_call.1} parent=1 // pred_check
      _
    $region11: #{tpu_custom_call.1} parent=1 // pred_check_branch
      %58 = sbr.rel (0) target = $region13
    $region12: #{tpu_custom_call.1} parent=1 // pred_region
      %60 = vsyncadd [#allocation4], 0
      %s61 = sshll.u32 [#allocation5], 4
      %s62 = int_to_ptr.vmem [resolvable:$true] %s61
      %s63 = sshll.u32 %s1, 4
      %s64 = int_to_ptr.hbm [resolvable:$true] %s63
      %69 = dma.vmem_to_hbm [thread:$0]  %s62, 256, %s64, [#allocation4], 128, 128, 8
    $region13: #{tpu_custom_call.1} parent=1 // pred_fallthru
      _
    // Predicated region
    $region14: #{tpu_custom_call.1} parent=1 // pred_check
      _
    $region15: #{tpu_custom_call.1} parent=1 // pred_check_branch
      %71 = sbr.rel (0) target = $region17
    $region16: #{tpu_custom_call.1} parent=1 // pred_region
      %73 = dma.done [#allocation4], 256
    $region17: #{tpu_custom_call.1} parent=1 // pred_fallthru
      _
    %74 = vsyncpa [#allocation3], 1
    %75 = vsyncpa [#allocation4], 1

</llo_original>
